<compile_context>
chip_gen: v7x
topology: tpu7x:2x2x1
jax: 0.10.0
libtpu: 0.0.40
codegen_flags: <defaults>
</compile_context>

<pallas_src>
import jax
import jax.numpy as jnp
from jax.experimental import pallas as pl
from jax.experimental.pallas import tpu as pltpu

_TARGET_BLOCK_BYTES = 4 * 1024 * 1024      # ~4 MiB blocks: near-roofline, VMEM-safe
_MAX_LANE_WIDTH = 32768                    # wide, lane-dense output slabs
_VMEM_LIMIT_BYTES = 32 * 1024 * 1024       # raise v5e's 16 MiB default; safe on v7x


def _identity_copy_kernel(x_ref, o_ref):
    # Pure elementwise pass-through of the current VMEM tile.
    o_ref[...] = x_ref[...]


def _sublane_multiple(dtype) -> int:
    # f32 -> 8 rows, bf16 -> 16, int8/fp8 -> 32 (sub-32-bit dtypes pack on sublanes).
    itemsize = jnp.dtype(dtype).itemsize
    return max(8, 32 // itemsize)


def _pallas_identity_copy(x):
    """Materialized identity copy of `x` using a tiled Pallas kernel."""
    total = x.size
    itemsize = jnp.dtype(x.dtype).itemsize

    if total == 0 or total % 128 != 0:
        # TODO(synk): degenerate / non-lane-aligned sizes: forward is an identity,
        # so we just return x instead of running a padded copy kernel.
        return x

    # Pick the widest lane count C (multiple of 128, power-of-two scaled) that
    # exactly divides the element count -> no padding, no slicing.
    C = 128
    while C * 2 <= min(total, _MAX_LANE_WIDTH) and total % (C * 2) == 0:
        C *= 2
    R = total // C

    sublane = _sublane_multiple(x.dtype)
    rows_per_block = (_TARGET_BLOCK_BYTES // (C * itemsize)) // sublane * sublane
    rows_per_block = max(sublane, rows_per_block)

    orig_shape = x.shape
    x2d = x.reshape(R, C)

    if R <= rows_per_block:
        # Whole array fits in one block: block_shape == full array dims.
        block_shape = (R, C)
        grid = (1,)
    else:
        block_shape = (rows_per_block, C)
        grid = (pl.cdiv(R, rows_per_block),)  # partial last block handled by Pallas

    bytes_accessed = 2 * total * itemsize  # one HBM read + one HBM write

    y2d = pl.pallas_call(
        _identity_copy_kernel,
        out_shape=jax.ShapeDtypeStruct((R, C), x.dtype),
        grid_spec=pltpu.PrefetchScalarGridSpec(
            num_scalar_prefetch=0,
            grid=grid,
            in_specs=[pl.BlockSpec(block_shape, lambda i: (i, 0))],
            out_specs=pl.BlockSpec(block_shape, lambda i: (i, 0)),
        ),
        compiler_params=pltpu.CompilerParams(
            dimension_semantics=("parallel",),
            vmem_limit_bytes=_VMEM_LIMIT_BYTES,
        ),
        cost_estimate=pl.CostEstimate(
            flops=0, transcendentals=0, bytes_accessed=bytes_accessed
        ),
    )(x2d)

    return y2d.reshape(orig_shape)


def remove_labels_forward(x, labels_keep=None, labels_remove=None, *, materialize=False):
    """JAX/Pallas equivalent of _RemoveLabels.forward.

    The reference forward returns its input unchanged and never uses
    labels_keep / labels_remove, so the default (and optimal) path moves
    zero bytes and just returns `x`.  Set `materialize=True` if a freshly
    materialized buffer is contractually required; that path runs the
    optimized Pallas identity-copy kernel.
    """
    if not materialize:
        return x
    return _pallas_identity_copy(x)


if __name__ == "__main__":
    key = jax.random.PRNGKey(0)
    # Small NCHW intensity map: batch=2, channels=4, spatial=16x16.
    x = jax.random.normal(key, (2, 4, 16, 16), dtype=jnp.float32)

    # Optimal path: pure identity, zero bytes moved.
    y_fast = remove_labels_forward(x)
    y_fast = jax.block_until_ready(y_fast)

    # Exercise the Pallas copy kernel path as well.
    y_copy = remove_labels_forward(x, materialize=True)
    y_copy = jax.block_until_ready(y_copy)

    assert y_fast.shape == x.shape and y_fast.dtype == x.dtype
    assert y_copy.shape == x.shape and y_copy.dtype == x.dtype
    assert bool(jnp.all(y_fast == x))
    assert bool(jnp.all(y_copy == x))
    print("KERNEL_OK")
</pallas_src>

<mosaic_0001>
module attributes {stable_mosaic.version = 11 : i64} {
  func.func @_identity_copy_kernel(%arg0: i32, %arg1: memref<1x2048xf32, #tpu.memory_space<vmem>>, %arg2: memref<1x2048xf32, #tpu.memory_space<vmem>>) attributes {dimension_semantics = [#tpu.dimension_semantics<parallel>], iteration_bounds = array<i64: 1>, scalar_prefetch = 0 : i64, scratch_operands = 0 : i64, tpu.core_type = #tpu.core_type<tc>, window_params = [{transform_indices = @transform_0, window_bounds = array<i64: 1, 2048>}, {transform_indices = @transform_1, window_bounds = array<i64: 1, 2048>}]} {
    %c0 = arith.constant 0 : index
    %c0_0 = arith.constant 0 : index
    %0 = vector.load %arg1[%c0, %c0_0] : memref<1x2048xf32, #tpu.memory_space<vmem>>, vector<1x2048xf32>
    %c0_1 = arith.constant 0 : index
    %c0_2 = arith.constant 0 : index
    %1 = vector.load %arg2[%c0_1, %c0_2] : memref<1x2048xf32, #tpu.memory_space<vmem>>, vector<1x2048xf32>
    tpu.vector_store %arg2[%c0_1, %c0_2], %0 {strides = array<i32>} : memref<1x2048xf32, #tpu.memory_space<vmem>>, vector<1x2048xf32>,
    return
  }
  func.func @transform_0(%arg0: i32) -> (i32, i32) {
    %c0_i32 = arith.constant 0 : i32
    %c0_i32_0 = arith.constant 0 : i32
    return %arg0, %c0_i32 : i32, i32
  }
  func.func @transform_1(%arg0: i32) -> (i32, i32) {
    %c0_i32 = arith.constant 0 : i32
    %c0_i32_0 = arith.constant 0 : i32
    return %arg0, %c0_i32 : i32, i32
  }
}

</mosaic_0001>

<llo_original>
// kernel: tpu_custom_call.1
$region0: #{tpu_custom_call.1}
  #allocation0 [shape = 'u32[]', space=smem, size = 0x4, offset = 0x4, fixed_abs, tag = 'smem constant byte address 0x4 - core index']
  #allocation1 [shape = 'u32[144,128]{1,0:T(1,128)}', space=vmem, size = 0x12000, scoped, tag = 'internal scratch']
  %s0 = inlined_call_operand.hbm [shape: f32[1,2048], index: 0, kind: input, shape index: {}]
  %s1 = inlined_call_operand.hbm [shape: f32[1,2048], index: 1, kind: output, shape index: {}]
  %s2 = sld [smem:[#allocation0]]
  $region18: #{tpu_custom_call.1} parent=0
    _
  %s4 = ssub.s32 1, %s2
  %s5 = scalar_select 0, %s4, %s2
  $region1: #{tpu_custom_call.1} parent=0
    #allocation2 [shape = 'u8[8192]{0}', space=vmem, size = 0x2000, scoped, tag = 'input window, operand 0, single buffered']
    #allocation3 [shape = 's32[1]{0}', space=sflag, size = 0x4, scoped, tag = 'scoped memory for tpu_custom_call.1']
    #allocation4 [shape = 's32[1]{0}', space=sflag, size = 0x4, scoped, tag = 'scoped memory for tpu_custom_call.1']
    #allocation5 [shape = 'u8[8192]{0}', space=vmem, size = 0x2000, scoped, tag = 'output window, operand 0, single buffered']
    %6 = vsyncpa [#allocation3], 0
    %7 = vsyncpa [#allocation4], 0
    // Predicated region
    $region2: #{tpu_custom_call.1} parent=1 // pred_check
      _
    $region3: #{tpu_custom_call.1} parent=1 // pred_check_branch
      %9 = sbr.rel (0) target = $region5
    $region4: #{tpu_custom_call.1} parent=1 // pred_region
      %s11 = ssub.s32 256, 256
      %12 = vsyncadd [#allocation3], %s11
      %s14 = sshll.u32 [#allocation2], 4
      %s15 = int_to_ptr.vmem [resolvable:$true] %s14
      %17 = dma.hbm_to_vmem [thread:$0]  %s0, 256, %s15, [#allocation3]
    $region5: #{tpu_custom_call.1} parent=1 // pred_fallthru
      _
    // Predicated region
    $region6: #{tpu_custom_call.1} parent=1 // pred_check
      _
    $region7: #{tpu_custom_call.1} parent=1 // pred_check_branch
      %19 = sbr.rel (0) target = $region9
    $region8: #{tpu_custom_call.1} parent=1 // pred_region
      %20 = dma.done [#allocation3], 256
    $region9: #{tpu_custom_call.1} parent=1 // pred_fallthru
      _
    %v21 = vld [vmem:[#allocation2] sm:$0xff]
    %v22 = vld [vmem:[#allocation2 + $0x8] sm:$0xff]
    %23 = vst [vmem:[#allocation5] sm:$0xff] %v21
    %24 = vst [vmem:[#allocation5 + $0x8] sm:$0xff] %v22
    // Predicated region
    $region10: #{tpu_custom_call.1} parent=1 // pred_check
      _
    $region11: #{tpu_custom_call.1} parent=1 // pred_check_branch
      %26 = sbr.rel (0) target = $region13
    $region12: #{tpu_custom_call.1} parent=1 // pred_region
      %s28 = ssub.s32 256, 256
      %29 = vsyncadd [#allocation4], %s28
      %s31 = sshll.u32 [#allocation5], 4
      %s32 = int_to_ptr.vmem [resolvable:$true] %s31
      %34 = dma.vmem_to_hbm [thread:$0]  %s32, 256, %s1, [#allocation4]
    $region13: #{tpu_custom_call.1} parent=1 // pred_fallthru
      _
    // Predicated region
    $region14: #{tpu_custom_call.1} parent=1 // pred_check
      _
    $region15: #{tpu_custom_call.1} parent=1 // pred_check_branch
      %36 = sbr.rel (0) target = $region17
    $region16: #{tpu_custom_call.1} parent=1 // pred_region
      %37 = dma.done [#allocation4], 256
    $region17: #{tpu_custom_call.1} parent=1 // pred_fallthru
      _
    %38 = vsyncpa [#allocation3], 1
    %39 = vsyncpa [#allocation4], 1

</llo_original>
